<compile_context>
chip_gen: v7x
topology: tpu7x:2x2x1
jax: 0.10.0
libtpu: 0.0.40
codegen_flags: <defaults>
</compile_context>

<pallas_src>
import functools

import jax
import jax.numpy as jnp
from jax.experimental import pallas as pl
from jax.experimental.pallas import tpu as pltpu

EPS = 1e-3
CIN = 6         # fixed by the module: Conv2d(6, 32, ...)
COUT = 32
KH = KW = 3
KDIM = KH * KW * CIN        # 54 — fused contraction dim (one dot per tile)


def _conv_stats_kernel(t_ref, w_ref, sum_ref, m2_ref, *, inv_cnt):
    """Pass 1: conv tile + per-tile BN partials.

    t_ref:   (1, KDIM, THW)  tap-packed activations (lane dim = THW, lane dense)
    w_ref:   (COUT, KDIM)    packed weights, resident across grid steps
    sum_ref: (1, 1, COUT, 1) per-tile per-channel sum
    m2_ref:  (1, 1, COUT, 1) per-tile per-channel centered sum of squares
    """
    conv = jnp.dot(w_ref[...], t_ref[0], preferred_element_type=jnp.float32)  # (COUT, THW)
    s = jnp.sum(conv, axis=1, keepdims=True)        # (COUT, 1)
    d = conv - s * inv_cnt                          # center by the tile mean (stable var)
    m2 = jnp.sum(d * d, axis=1, keepdims=True)      # (COUT, 1)
    sum_ref[0, 0] = s
    m2_ref[0, 0] = m2


def _conv_bn_prelu_kernel(t_ref, w_ref, sc_ref, sh_ref, a_ref, o_ref):
    """Pass 2: recompute conv, apply BN scale/shift + PReLU, write (1, COUT, THW)."""
    conv = jnp.dot(w_ref[...], t_ref[0], preferred_element_type=jnp.float32)  # (COUT, THW)
    y = conv * sc_ref[...] + sh_ref[...]            # (COUT,1) params broadcast over lanes
    alpha = a_ref[0, 0]
    o_ref[0] = jnp.where(y >= 0.0, y, alpha * y)


def _pick_hw_tile(hw, n_images, cap=4096):
    """Largest 128-multiple divisor of Ho*Wo (<= cap); prefer >= 4 total grid steps."""
    cands = [t for t in range(128, min(hw, cap) + 1, 128) if hw % t == 0]
    if not cands:
        return hw                       # fallback: full dim (legal block, masked stores)
    good = [t for t in cands if n_images * (hw // t) >= 4]
    return max(good) if good else max(cands)


@jax.jit
def enet_initial_block(x, w, b, gamma, beta, alpha):
    """x: (N, 6, H, W) f32 NCHW -> (N, 32, H//2, W//2) f32 NCHW."""
    # Conv bias accepted for interface parity; exactly cancelled by train-mode BN.
    del b
    n, cin, h, wdt = x.shape
    assert cin == CIN, "module is Conv2d(6 -> 32)"
    assert h % 2 == 0 and wdt % 2 == 0, "even spatial dims expected"
    ho, wo = h // 2, wdt // 2
    hw = ho * wo
    m_total = n * hw

    # ---- wrapper glue: one tap-packed view (N, 54, Ho*Wo), K order = (kh, kw, cin).
    # Built from 9 strided slices of the padded input concatenated in one fusion.
    xf = x.astype(jnp.float32)
    xpad = jnp.pad(xf, ((0, 0), (0, 0), (1, 1), (1, 1)))           # (N, 6, H+2, W+2)
    taps = jnp.concatenate(
        [xpad[:, :, kh:kh + 2 * ho:2, kw:kw + 2 * wo:2]
         for kh in range(KH) for kw in range(KW)],
        axis=1,
    ).reshape(n, KDIM, hw)                                         # (N, 54, Ho*Wo)

    # weights (COUT, CIN, 3, 3) -> (COUT, 54) matching the (kh, kw, cin) packing order
    w_cat = jnp.transpose(w.astype(jnp.float32), (0, 2, 3, 1)).reshape(COUT, KDIM)

    thw = _pick_hw_tile(hw, n)
    num_hw = hw // thw
    inv_cnt = 1.0 / float(thw)

    cparams = pltpu.CompilerParams(
        dimension_semantics=("parallel", "parallel"),   # independent tiles -> megacore
        vmem_limit_bytes=32 * 1024 * 1024,              # safe on v5e/v6e/v7x; tiles << limit
    )

    t_spec = pl.BlockSpec((1, KDIM, thw), lambda ni, ti: (ni, 0, ti))
    w_spec = pl.BlockSpec((COUT, KDIM), lambda ni, ti: (0, 0))       # resident
    st_spec = pl.BlockSpec((1, 1, COUT, 1), lambda ni, ti: (ni, ti, 0, 0))

    # ---- pass 1: one fused dot per tile + per-tile (sum, centered M2) ----
    psum, pm2 = pl.pallas_call(
        functools.partial(_conv_stats_kernel, inv_cnt=inv_cnt),
        grid=(n, num_hw),
        in_specs=[t_spec, w_spec],
        out_specs=(st_spec, st_spec),
        out_shape=(
            jax.ShapeDtypeStruct((n, num_hw, COUT, 1), jnp.float32),
            jax.ShapeDtypeStruct((n, num_hw, COUT, 1), jnp.float32),
        ),
        compiler_params=cparams,
    )(taps, w_cat)

    # ---- BN finalize: O(COUT)=32-element glue; Welford-style merge of per-tile stats.
    s_t = psum[..., 0]                                  # (n, num_hw, COUT) per-tile sums
    m2_t = pm2[..., 0]                                  # (n, num_hw, COUT) per-tile M2
    mean = jnp.sum(s_t, axis=(0, 1)) / m_total          # (COUT,)
    tile_mean = s_t * inv_cnt
    var = (jnp.sum(m2_t, axis=(0, 1)) +
           float(thw) * jnp.sum((tile_mean - mean) ** 2, axis=(0, 1))) / m_total
    var = jnp.maximum(var, 0.0)                         # biased (train-mode) variance
    scale = gamma.astype(jnp.float32) * jax.lax.rsqrt(var + EPS)   # gamma folded in
    shift = beta.astype(jnp.float32) - mean * scale

    # ---- pass 2: recompute conv, apply scale/shift + PReLU, write (N, COUT, Ho*Wo) ----
    param_spec = pl.BlockSpec((COUT, 1), lambda ni, ti: (0, 0))
    out = pl.pallas_call(
        _conv_bn_prelu_kernel,
        grid=(n, num_hw),
        in_specs=[t_spec, w_spec, param_spec, param_spec,
                  pl.BlockSpec((1, 1), lambda ni, ti: (0, 0))],
        out_specs=pl.BlockSpec((1, COUT, thw), lambda ni, ti: (ni, 0, ti)),
        out_shape=jax.ShapeDtypeStruct((n, COUT, hw), jnp.float32),
        compiler_params=cparams,
    )(taps, w_cat, scale.reshape(COUT, 1), shift.reshape(COUT, 1),
      alpha.reshape(1, 1).astype(jnp.float32))

    # (N, COUT, Ho*Wo) -> NCHW is a free reshape (no transpose / no extra HBM copy).
    return out.reshape(n, COUT, ho, wo)


def _reference(x, w, b, gamma, beta, alpha):
    """Plain-JAX reference (applies the conv bias; BN mean subtraction cancels it)."""
    y = jax.lax.conv_general_dilated(
        x.astype(jnp.float32), w.astype(jnp.float32),
        window_strides=(2, 2), padding=((1, 1), (1, 1)),
        dimension_numbers=("NCHW", "OIHW", "NCHW"),
    ) + b.reshape(1, -1, 1, 1)
    mean = jnp.mean(y, axis=(0, 2, 3), keepdims=True)
    var = jnp.mean((y - mean) ** 2, axis=(0, 2, 3), keepdims=True)
    y = (y - mean) / jnp.sqrt(var + EPS)
    y = y * gamma.reshape(1, -1, 1, 1) + beta.reshape(1, -1, 1, 1)
    return jnp.where(y >= 0, y, alpha * y)


if __name__ == "__main__":
    key = jax.random.PRNGKey(0)
    kx, kw_, kb = jax.random.split(key, 3)

    N, Cin, H, W = 2, 6, 16, 16
    Cout = 32

    x = jax.random.normal(kx, (N, Cin, H, W), dtype=jnp.float32)

    fan_in = Cin * KH * KW
    w = jax.random.normal(kw_, (Cout, Cin, KH, KW), dtype=jnp.float32) * (1.0 / fan_in) ** 0.5
    b = jax.random.normal(kb, (Cout,), dtype=jnp.float32) * 0.1
    gamma = jnp.ones((Cout,), dtype=jnp.float32)     # BatchNorm2d default weight
    beta = jnp.zeros((Cout,), dtype=jnp.float32)     # BatchNorm2d default bias
    alpha = jnp.array(0.25, dtype=jnp.float32)       # PReLU default (single parameter)

    out = jax.block_until_ready(enet_initial_block(x, w, b, gamma, beta, alpha))
    ref = jax.block_until_ready(_reference(x, w, b, gamma, beta, alpha))

    assert out.shape == (N, Cout, H // 2, W // 2)
    err = float(jnp.max(jnp.abs(out - ref)))
    assert err < 2e-4, f"max abs err {err}"
    print("KERNEL_OK")
</pallas_src>

<mosaic_0001>
module attributes {stable_mosaic.version = 11 : i64} {
  func.func @_conv_stats_kernel(%arg0: i32, %arg1: i32, %arg2: memref<1x54x64xf32, #tpu.memory_space<vmem>>, %arg3: memref<32x54xf32, #tpu.memory_space<vmem>>, %arg4: memref<1x1x32x1xf32, #tpu.memory_space<vmem>>, %arg5: memref<1x1x32x1xf32, #tpu.memory_space<vmem>>) attributes {dimension_semantics = [#tpu.dimension_semantics<parallel>, #tpu.dimension_semantics<parallel>], iteration_bounds = array<i64: 2, 1>, scalar_prefetch = 0 : i64, scratch_operands = 0 : i64, tpu.core_type = #tpu.core_type<tc>, window_params = [{transform_indices = @transform_0, window_bounds = array<i64: 1, 54, 64>}, {pipeline_mode = #tpu.pipeline_mode<synchronous>, transform_indices = @transform_1, window_bounds = array<i64: 32, 54>}, {transform_indices = @transform_2, window_bounds = array<i64: 1, 1, 32, 1>}, {transform_indices = @transform_3, window_bounds = array<i64: 1, 1, 32, 1>}]} {
    %c0 = arith.constant 0 : index
    %c0_0 = arith.constant 0 : index
    %0 = vector.load %arg3[%c0, %c0_0] : memref<32x54xf32, #tpu.memory_space<vmem>>, vector<32x54xf32>
    %c0_1 = arith.constant 0 : index
    %c0_2 = arith.constant 0 : index
    %c0_3 = arith.constant 0 : index
    %1 = vector.load %arg2[%c0_1, %c0_2, %c0_3] : memref<1x54x64xf32, #tpu.memory_space<vmem>>, vector<1x54x64xf32>
    %2 = vector.shape_cast %1 : vector<1x54x64xf32> to vector<54x64xf32>
    %cst = arith.constant dense<0.000000e+00> : vector<32x64xf32>
    %3 = tpu.matmul %0, %2, %cst {dimension_numbers = #tpu.dot_dimension_numbers<[1], [0], [0], [1], [0, 0, 1, 1], [], []>} : vector<32x54xf32>, vector<54x64xf32>, vector<32x64xf32> -> vector<32x64xf32>
    %cst_4 = arith.constant dense<0.000000e+00> : vector<32xf32>
    %4 = vector.multi_reduction <add>, %3, %cst_4 [1] : vector<32x64xf32> to vector<32xf32>
    %5 = vector.shape_cast %4 : vector<32xf32> to vector<32x1xf32>
    %cst_5 = arith.constant 1.562500e-02 : f32
    %6 = vector.broadcast %cst_5 : f32 to vector<32x1xf32>
    %7 = arith.mulf %5, %6 : vector<32x1xf32>
    %8 = vector.broadcast %7 : vector<32x1xf32> to vector<32x64xf32>
    %9 = arith.subf %3, %8 : vector<32x64xf32>
    %10 = arith.mulf %9, %9 : vector<32x64xf32>
    %cst_6 = arith.constant dense<0.000000e+00> : vector<32xf32>
    %11 = vector.multi_reduction <add>, %10, %cst_6 [1] : vector<32x64xf32> to vector<32xf32>
    %12 = vector.shape_cast %11 : vector<32xf32> to vector<32x1xf32>
    %c0_7 = arith.constant 0 : index
    %c0_8 = arith.constant 0 : index
    %c0_9 = arith.constant 0 : index
    %c0_10 = arith.constant 0 : index
    %13 = vector.load %arg4[%c0_7, %c0_8, %c0_9, %c0_10] : memref<1x1x32x1xf32, #tpu.memory_space<vmem>>, vector<1x1x32x1xf32>
    %14 = vector.shape_cast %13 : vector<1x1x32x1xf32> to vector<32x1xf32>
    %15 = vector.shape_cast %5 : vector<32x1xf32> to vector<1x1x32x1xf32>
    tpu.vector_store %arg4[%c0_7, %c0_8, %c0_9, %c0_10], %15 {strides = array<i32>} : memref<1x1x32x1xf32, #tpu.memory_space<vmem>>, vector<1x1x32x1xf32>,
    %c0_11 = arith.constant 0 : index
    %c0_12 = arith.constant 0 : index
    %c0_13 = arith.constant 0 : index
    %c0_14 = arith.constant 0 : index
    %16 = vector.load %arg5[%c0_11, %c0_12, %c0_13, %c0_14] : memref<1x1x32x1xf32, #tpu.memory_space<vmem>>, vector<1x1x32x1xf32>
    %17 = vector.shape_cast %16 : vector<1x1x32x1xf32> to vector<32x1xf32>
    %18 = vector.shape_cast %12 : vector<32x1xf32> to vector<1x1x32x1xf32>
    tpu.vector_store %arg5[%c0_11, %c0_12, %c0_13, %c0_14], %18 {strides = array<i32>} : memref<1x1x32x1xf32, #tpu.memory_space<vmem>>, vector<1x1x32x1xf32>,
    return
  }
  func.func @transform_0(%arg0: i32, %arg1: i32) -> (i32, i32, i32) {
    %c0_i32 = arith.constant 0 : i32
    %c0_i32_0 = arith.constant 0 : i32
    return %arg0, %c0_i32, %arg1 : i32, i32, i32
  }
  func.func @transform_1(%arg0: i32, %arg1: i32) -> (i32, i32) {
    %c0_i32 = arith.constant 0 : i32
    %c0_i32_0 = arith.constant 0 : i32
    %c0_i32_1 = arith.constant 0 : i32
    return %c0_i32, %c0_i32_0 : i32, i32
  }
  func.func @transform_2(%arg0: i32, %arg1: i32) -> (i32, i32, i32, i32) {
    %c0_i32 = arith.constant 0 : i32
    %c0_i32_0 = arith.constant 0 : i32
    %c0_i32_1 = arith.constant 0 : i32
    return %arg0, %arg1, %c0_i32, %c0_i32_0 : i32, i32, i32, i32
  }
  func.func @transform_3(%arg0: i32, %arg1: i32) -> (i32, i32, i32, i32) {
    %c0_i32 = arith.constant 0 : i32
    %c0_i32_0 = arith.constant 0 : i32
    %c0_i32_1 = arith.constant 0 : i32
    return %arg0, %arg1, %c0_i32, %c0_i32_0 : i32, i32, i32, i32
  }
}

module attributes {stable_mosaic.version = 11 : i64} {
  func.func @_conv_bn_prelu_kernel(%arg0: i32, %arg1: i32, %arg2: memref<1x54x64xf32, #tpu.memory_space<vmem>>, %arg3: memref<32x54xf32, #tpu.memory_space<vmem>>, %arg4: memref<32x1xf32, #tpu.memory_space<vmem>>, %arg5: memref<32x1xf32, #tpu.memory_space<vmem>>, %arg6: memref<1x1xf32, #tpu.memory_space<vmem>>, %arg7: memref<1x32x64xf32, #tpu.memory_space<vmem>>) attributes {dimension_semantics = [#tpu.dimension_semantics<parallel>, #tpu.dimension_semantics<parallel>], iteration_bounds = array<i64: 2, 1>, scalar_prefetch = 0 : i64, scratch_operands = 0 : i64, tpu.core_type = #tpu.core_type<tc>, window_params = [{transform_indices = @transform_0, window_bounds = array<i64: 1, 54, 64>}, {pipeline_mode = #tpu.pipeline_mode<synchronous>, transform_indices = @transform_1, window_bounds = array<i64: 32, 54>}, {pipeline_mode = #tpu.pipeline_mode<synchronous>, transform_indices = @transform_2, window_bounds = array<i64: 32, 1>}, {pipeline_mode = #tpu.pipeline_mode<synchronous>, transform_indices = @transform_3, window_bounds = array<i64: 32, 1>}, {pipeline_mode = #tpu.pipeline_mode<synchronous>, transform_indices = @transform_4, window_bounds = array<i64: 1, 1>}, {transform_indices = @transform_5, window_bounds = array<i64: 1, 32, 64>}]} {
    %c0 = arith.constant 0 : index
    %c0_0 = arith.constant 0 : index
    %0 = vector.load %arg3[%c0, %c0_0] : memref<32x54xf32, #tpu.memory_space<vmem>>, vector<32x54xf32>
    %c0_1 = arith.constant 0 : index
    %c0_2 = arith.constant 0 : index
    %c0_3 = arith.constant 0 : index
    %1 = vector.load %arg2[%c0_1, %c0_2, %c0_3] : memref<1x54x64xf32, #tpu.memory_space<vmem>>, vector<1x54x64xf32>
    %2 = vector.shape_cast %1 : vector<1x54x64xf32> to vector<54x64xf32>
    %cst = arith.constant dense<0.000000e+00> : vector<32x64xf32>
    %3 = tpu.matmul %0, %2, %cst {dimension_numbers = #tpu.dot_dimension_numbers<[1], [0], [0], [1], [0, 0, 1, 1], [], []>} : vector<32x54xf32>, vector<54x64xf32>, vector<32x64xf32> -> vector<32x64xf32>
    %c0_4 = arith.constant 0 : index
    %c0_5 = arith.constant 0 : index
    %4 = vector.load %arg4[%c0_4, %c0_5] : memref<32x1xf32, #tpu.memory_space<vmem>>, vector<32x1xf32>
    %5 = vector.broadcast %4 : vector<32x1xf32> to vector<32x64xf32>
    %6 = arith.mulf %3, %5 : vector<32x64xf32>
    %c0_6 = arith.constant 0 : index
    %c0_7 = arith.constant 0 : index
    %7 = vector.load %arg5[%c0_6, %c0_7] : memref<32x1xf32, #tpu.memory_space<vmem>>, vector<32x1xf32>
    %8 = vector.broadcast %7 : vector<32x1xf32> to vector<32x64xf32>
    %9 = arith.addf %6, %8 : vector<32x64xf32>
    %c0_8 = arith.constant 0 : index
    %c0_9 = arith.constant 0 : index
    %10 = vector.load %arg6[%c0_8, %c0_9] : memref<1x1xf32, #tpu.memory_space<vmem>>, vector<1x1xf32>
    %11 = vector.extract %10[0, 0] : f32 from vector<1x1xf32>
    %cst_10 = arith.constant 0.000000e+00 : f32
    %12 = vector.broadcast %cst_10 : f32 to vector<32x64xf32>
    %13 = arith.cmpf oge, %9, %12 : vector<32x64xf32>
    %14 = vector.broadcast %11 : f32 to vector<32x64xf32>
    %15 = arith.mulf %14, %9 : vector<32x64xf32>
    %16 = arith.select %13, %9, %15 : vector<32x64xi1>, vector<32x64xf32>
    %c0_11 = arith.constant 0 : index
    %c0_12 = arith.constant 0 : index
    %c0_13 = arith.constant 0 : index
    %17 = vector.load %arg7[%c0_11, %c0_12, %c0_13] : memref<1x32x64xf32, #tpu.memory_space<vmem>>, vector<1x32x64xf32>
    %18 = vector.shape_cast %17 : vector<1x32x64xf32> to vector<32x64xf32>
    %19 = vector.shape_cast %16 : vector<32x64xf32> to vector<1x32x64xf32>
    tpu.vector_store %arg7[%c0_11, %c0_12, %c0_13], %19 {strides = array<i32>} : memref<1x32x64xf32, #tpu.memory_space<vmem>>, vector<1x32x64xf32>,
    return
  }
  func.func @transform_0(%arg0: i32, %arg1: i32) -> (i32, i32, i32) {
    %c0_i32 = arith.constant 0 : i32
    %c0_i32_0 = arith.constant 0 : i32
    return %arg0, %c0_i32, %arg1 : i32, i32, i32
  }
  func.func @transform_1(%arg0: i32, %arg1: i32) -> (i32, i32) {
    %c0_i32 = arith.constant 0 : i32
    %c0_i32_0 = arith.constant 0 : i32
    %c0_i32_1 = arith.constant 0 : i32
    return %c0_i32, %c0_i32_0 : i32, i32
  }
  func.func @transform_2(%arg0: i32, %arg1: i32) -> (i32, i32) {
    %c0_i32 = arith.constant 0 : i32
    %c0_i32_0 = arith.constant 0 : i32
    %c0_i32_1 = arith.constant 0 : i32
    return %c0_i32, %c0_i32_0 : i32, i32
  }
  func.func @transform_3(%arg0: i32, %arg1: i32) -> (i32, i32) {
    %c0_i32 = arith.constant 0 : i32
    %c0_i32_0 = arith.constant 0 : i32
    %c0_i32_1 = arith.constant 0 : i32
    return %c0_i32, %c0_i32_0 : i32, i32
  }
  func.func @transform_4(%arg0: i32, %arg1: i32) -> (i32, i32) {
    %c0_i32 = arith.constant 0 : i32
    %c0_i32_0 = arith.constant 0 : i32
    %c0_i32_1 = arith.constant 0 : i32
    return %c0_i32, %c0_i32_0 : i32, i32
  }
  func.func @transform_5(%arg0: i32, %arg1: i32) -> (i32, i32, i32) {
    %c0_i32 = arith.constant 0 : i32
    %c0_i32_0 = arith.constant 0 : i32
    return %arg0, %c0_i32, %arg1 : i32, i32, i32
  }
}

</mosaic_0001>

<llo_original>
// kernel: enet_initial_block.3
$region0: #{enet_initial_block.3}
  #allocation0 [shape = 'u32[]', space=smem, size = 0x4, offset = 0x4, fixed_abs, tag = 'smem constant byte address 0x4 - core index']
  #allocation1 [shape = 'u32[144,128]{1,0:T(1,128)}', space=vmem, size = 0x12000, scoped, tag = 'internal scratch']
  #allocation2 [shape = 'f32[1,1]{1,0:T(1,128)S(1)}', space=vmem, size = 0x200, scoped, tag = 'scoped memory for enet_initial_block.3']
  %s0 = inlined_call_operand.vmem [shape: f32[2,54,64], index: 0, kind: input, shape index: {}]
  %s1 = inlined_call_operand.vmem [shape: f32[32,54], index: 1, kind: input, shape index: {}]
  %s2 = inlined_call_operand.vmem [shape: f32[32,1], index: 2, kind: input, shape index: {}]
  %s3 = inlined_call_operand.vmem [shape: f32[32,1], index: 3, kind: input, shape index: {}]
  %s4 = inlined_call_operand.<no memory space> [shape: f32[1,1], index: 4, kind: input, shape index: {}]
  %s5 = inlined_call_operand.vmem [shape: f32[2,32,64], index: 5, kind: output, shape index: {}]
  %s6 = sld [smem:[#allocation0]]
  $region53: #{enet_initial_block.3} parent=0
    _
  %s8 = ssub.s32 1, %s6
  %s9 = scalar_select 0, %s8, %s6
  %v10 = vstv %s4
  %11 = vst [vmem:[#allocation2] sm:$0x1] %v10
  loop: start=0, step=1, limit=4
  $region2: #{enet_initial_block.3} parent=0 // loop_pre_header
    _
  $region3: #{enet_initial_block.3} parent=0 // loop_header
    %s13 = sphi 0, %s17
    %p14 = scmp.ge.s32.totalorder %s13, 4
    %s20 = sphi 0, %s32
    %s21 = sphi 0, %s28
    %s22 = sphi 0, %s20
    %s23 = sphi 0, %s21
    %s24 = sphi 0, %s22
    %s25 = sphi 0, %s23
    %s37 = sphi 0, %s39
    %s40 = sphi 0, %s37
    %s41 = sphi 0, %s40
    %s57 = sphi 0, %s41
    %s61 = sphi 0, %s61
    %s63 = sphi 0, %s61
    %s64 = sphi 0, %s63
    %s78 = sphi 0, %s64
    %s82 = sphi 0, %s82
    %s84 = sphi 0, %s82
    %s85 = sphi 0, %s84
    %s99 = sphi 0, %s85
    %s103 = sphi 0, %s103
    %s105 = sphi 0, %s103
    %s106 = sphi 0, %s105
    %s120 = sphi 0, %s106
    %s124 = sphi 0, %s124
    %s126 = sphi 0, %s124
    %s127 = sphi 0, %s126
    %s141 = sphi 0, %s127
    %s149 = sphi 0, %s151
    %s152 = sphi 0, %s149
    %s153 = sphi 0, %s152
    %s169 = sphi 0, %s153
  $region4: #{enet_initial_block.3} parent=0 // loop_header_branch
    %16 = sbr.rel (%p14) target = $region8
  $region5: #{enet_initial_block.3} parent=0 // loop_body
    %s18 = ssub.s32 %s13, 1
    %s19 = ssub.s32 %s13, 2
    %s26 = sadd.s32 1, %s21
    %p27 = scmp.ge.s32.totalorder %s26, 1
    %s28 = scalar_select %p27, 0, %s26
    %s29 = sadd.s32 1, %s20
    %s30 = scalar_select %p27, %s29, %s20
    %p31 = scmp.ge.s32.totalorder %s30, 2
    %s32 = scalar_select %p31, 0, %s30
    %s33 = ssub.s32 %s20, %s32
    %s34 = ssub.s32 %s21, %s28
    %s35 = sor.u32 %s33, %s34
    %p36 = scmp.eq.s32.totalorder %s35, 0
    %s38 = sadd.s32 %s37, 1
    %s39 = scalar_select %p36, %s37, %s38
    %p42 = pneg %p36
    %p43 = scmp.eq.s32.totalorder %s13, 1
    %p44 = por %p42, %p43
    %p45 = scmp.ne.s32.totalorder %s37, %s40
    %p46 = scmp.eq.s32.totalorder %s13, 0
    %p47 = por %p45, %p46
    %p48 = scmp.ne.s32.totalorder %s37, %s40
    %p49 = scmp.eq.s32.totalorder %s18, 1
    %p50 = por %p48, %p49
    %p51 = scmp.ne.s32.totalorder %s40, %s41
    %p52 = scmp.eq.s32.totalorder %s18, 0
    %p53 = por %p51, %p52
    %p54 = scmp.ne.s32.totalorder %s40, %s41
    %p55 = scmp.eq.s32.totalorder %s19, 1
    %p56 = por %p54, %p55
    %p58 = scmp.ne.s32.totalorder %s41, %s57
    %p59 = scmp.eq.s32.totalorder %s19, 0
    %p60 = por %p58, %p59
    %s62 = sadd.s32 %s61, 1
    %p65 = scmp.eq.s32.totalorder %s13, 1
    %p66 = scmp.ne.s32.totalorder %s61, %s63
    %p67 = scmp.eq.s32.totalorder %s13, 0
    %p68 = por %p66, %p67
    %p69 = scmp.ne.s32.totalorder %s61, %s63
    %p70 = scmp.eq.s32.totalorder %s18, 1
    %p71 = por %p69, %p70
    %p72 = scmp.ne.s32.totalorder %s63, %s64
    %p73 = scmp.eq.s32.totalorder %s18, 0
    %p74 = por %p72, %p73
    %p75 = scmp.ne.s32.totalorder %s63, %s64
    %p76 = scmp.eq.s32.totalorder %s19, 1
    %p77 = por %p75, %p76
    %p79 = scmp.ne.s32.totalorder %s64, %s78
    %p80 = scmp.eq.s32.totalorder %s19, 0
    %p81 = por %p79, %p80
    %s83 = sadd.s32 %s82, 1
    %p86 = scmp.eq.s32.totalorder %s13, 1
    %p87 = scmp.ne.s32.totalorder %s82, %s84
    %p88 = scmp.eq.s32.totalorder %s13, 0
    %p89 = por %p87, %p88
    %p90 = scmp.ne.s32.totalorder %s82, %s84
    %p91 = scmp.eq.s32.totalorder %s18, 1
    %p92 = por %p90, %p91
    %p93 = scmp.ne.s32.totalorder %s84, %s85
    %p94 = scmp.eq.s32.totalorder %s18, 0
    %p95 = por %p93, %p94
    %p96 = scmp.ne.s32.totalorder %s84, %s85
    %p97 = scmp.eq.s32.totalorder %s19, 1
    %p98 = por %p96, %p97
    %p100 = scmp.ne.s32.totalorder %s85, %s99
    %p101 = scmp.eq.s32.totalorder %s19, 0
    %p102 = por %p100, %p101
    %s104 = sadd.s32 %s103, 1
    %p107 = scmp.eq.s32.totalorder %s13, 1
    %p108 = scmp.ne.s32.totalorder %s103, %s105
    %p109 = scmp.eq.s32.totalorder %s13, 0
    %p110 = por %p108, %p109
    %p111 = scmp.ne.s32.totalorder %s103, %s105
    %p112 = scmp.eq.s32.totalorder %s18, 1
    %p113 = por %p111, %p112
    %p114 = scmp.ne.s32.totalorder %s105, %s106
    %p115 = scmp.eq.s32.totalorder %s18, 0
    %p116 = por %p114, %p115
    %p117 = scmp.ne.s32.totalorder %s105, %s106
    %p118 = scmp.eq.s32.totalorder %s19, 1
    %p119 = por %p117, %p118
    %p121 = scmp.ne.s32.totalorder %s106, %s120
    %p122 = scmp.eq.s32.totalorder %s19, 0
    %p123 = por %p121, %p122
    %s125 = sadd.s32 %s124, 1
    %p128 = scmp.eq.s32.totalorder %s13, 1
    %p129 = scmp.ne.s32.totalorder %s124, %s126
    %p130 = scmp.eq.s32.totalorder %s13, 0
    %p131 = por %p129, %p130
    %p132 = scmp.ne.s32.totalorder %s124, %s126
    %p133 = scmp.eq.s32.totalorder %s18, 1
    %p134 = por %p132, %p133
    %p135 = scmp.ne.s32.totalorder %s126, %s127
    %p136 = scmp.eq.s32.totalorder %s18, 0
    %p137 = por %p135, %p136
    %p138 = scmp.ne.s32.totalorder %s126, %s127
    %p139 = scmp.eq.s32.totalorder %s19, 1
    %p140 = por %p138, %p139
    %p142 = scmp.ne.s32.totalorder %s127, %s141
    %p143 = scmp.eq.s32.totalorder %s19, 0
    %p144 = por %p142, %p143
    %s145 = ssub.s32 %s20, %s32
    %s146 = ssub.s32 %s21, %s28
    %s147 = sor.u32 %s145, %s146
    %p148 = scmp.eq.s32.totalorder %s147, 0
    %s150 = sadd.s32 %s149, 1
    %s151 = scalar_select %p148, %s149, %s150
    %p154 = pneg %p148
    %p155 = scmp.eq.s32.totalorder %s13, 1
    %p156 = por %p154, %p155
    %p157 = scmp.ne.s32.totalorder %s149, %s152
    %p158 = scmp.eq.s32.totalorder %s13, 0
    %p159 = por %p157, %p158
    %p160 = scmp.ne.s32.totalorder %s149, %s152
    %p161 = scmp.eq.s32.totalorder %s18, 1
    %p162 = por %p160, %p161
    %p163 = scmp.ne.s32.totalorder %s152, %s153
    %p164 = scmp.eq.s32.totalorder %s18, 0
    %p165 = por %p163, %p164
    %p166 = scmp.ne.s32.totalorder %s152, %s153
    %p167 = scmp.eq.s32.totalorder %s19, 1
    %p168 = por %p166, %p167
    %p170 = scmp.ne.s32.totalorder %s153, %s169
    %p171 = scmp.eq.s32.totalorder %s19, 0
    %p172 = por %p170, %p171
    %p173 = scmp.le.s32.totalorder 1, %s13
    %p174 = scmp.lt.s32.totalorder %s13, 3
    %p175 = pnand %p173, %p174
    %p176 = pneg %p175
    // Predicated region
    $region9: #{enet_initial_block.3} parent=5 // pred_check
      _
    $region10: #{enet_initial_block.3} parent=5 // pred_check_branch
      %178 = sbr.rel (%p175) target = $region12
    $region11: #{enet_initial_block.3} parent=5 // pred_region
      %s179 = ssub.s32 %s13, 1
      // Predicated region
      $region13: #{enet_initial_block.3} parent=11 // pred_check
        %p180 = pneg %p74
      $region14: #{enet_initial_block.3} parent=11 // pred_check_branch
        %182 = sbr.rel (%p180) target = $region16
      $region15: #{enet_initial_block.3} parent=11 // pred_region
        _
      $region16: #{enet_initial_block.3} parent=11 // pred_fallthru
        _
      // Predicated region
      $region17: #{enet_initial_block.3} parent=11 // pred_check
        %p183 = pneg %p95
      $region18: #{enet_initial_block.3} parent=11 // pred_check_branch
        %185 = sbr.rel (%p183) target = $region20
      $region19: #{enet_initial_block.3} parent=11 // pred_region
        _
      $region20: #{enet_initial_block.3} parent=11 // pred_fallthru
        _
      // Predicated region
      $region21: #{enet_initial_block.3} parent=11 // pred_check
        %p186 = pneg %p116
      $region22: #{enet_initial_block.3} parent=11 // pred_check_branch
        %188 = sbr.rel (%p186) target = $region24
      $region23: #{enet_initial_block.3} parent=11 // pred_region
        _
      $region24: #{enet_initial_block.3} parent=11 // pred_fallthru
        _
      // Predicated region
      $region25: #{enet_initial_block.3} parent=11 // pred_check
        %p189 = pneg %p137
      $region26: #{enet_initial_block.3} parent=11 // pred_check_branch
        %191 = sbr.rel (%p189) target = $region28
      $region27: #{enet_initial_block.3} parent=11 // pred_region
        _
      $region28: #{enet_initial_block.3} parent=11 // pred_fallthru
        _
    $region12: #{enet_initial_block.3} parent=5 // pred_fallthru
      _
    %p192 = scmp.lt.s32.totalorder %s13, 2
    // Predicated region
    $region29: #{enet_initial_block.3} parent=5 // pred_check
      %p193 = pneg %p192
    $region30: #{enet_initial_block.3} parent=5 // pred_check_branch
      %195 = sbr.rel (%p193) target = $region32
    $region31: #{enet_initial_block.3} parent=5 // pred_region
      // Predicated region
      $region33: #{enet_initial_block.3} parent=31 // pred_check
        %p196 = pneg %p47
      $region34: #{enet_initial_block.3} parent=31 // pred_check_branch
        %198 = sbr.rel (%p196) target = $region36
      $region35: #{enet_initial_block.3} parent=31 // pred_region
        %p199 = scmp.lt.s32.totalorder %s20, 1
        %s200 = scalar_select %p199, %s20, 1
        %p201 = scmp.lt.s32.totalorder %s21, 0
        %s202 = scalar_select %p201, %s21, 0
        %s203 = smul.addr %s200, 7
        %s204 = sadd.s32 %s202, %s203
        %s205 = smul.addr %s204, 8
        %s206 = scalar_lea.vmem %s0, %s205
      $region36: #{enet_initial_block.3} parent=31 // pred_fallthru
        _
    $region32: #{enet_initial_block.3} parent=5 // pred_fallthru
      _
    %p207 = scmp.le.s32.totalorder 1, %s13
    %p208 = scmp.lt.s32.totalorder %s13, 3
    %p209 = pnand %p207, %p208
    %p210 = pneg %p209
    // Predicated region
    $region37: #{enet_initial_block.3} parent=5 // pred_check
      _
    $region38: #{enet_initial_block.3} parent=5 // pred_check_branch
      %212 = sbr.rel (%p209) target = $region40
    $region39: #{enet_initial_block.3} parent=5 // pred_region
      %s213 = ssub.s32 %s13, 1
      %p214 = scmp.lt.s32.totalorder %s22, 1
      %s215 = scalar_select %p214, %s22, 1
      %p216 = scmp.lt.s32.totalorder %s23, 0
      %s217 = scalar_select %p216, %s23, 0
      %s218 = smul.addr %s215, 7
      %s219 = sadd.s32 %s217, %s218
      %s220 = smul.addr %s219, 8
      %s221 = scalar_lea.vmem %s0, %s220
      %p222 = pneg %p53
      %p223 = pneg %p50
      %p224 = pneg %p74
      %p225 = pneg %p71
      %p226 = pneg %p95
      %p227 = pneg %p92
      %p228 = pneg %p116
      %p229 = pneg %p113
      %p230 = pneg %p137
      %p231 = pneg %p134
      %p232 = pneg %p165
      %p233 = pneg %p162
      %p234 = scmp.lt.s32.totalorder %s22, 1
      %s235 = scalar_select %p234, %s22, 1
      %p236 = scmp.lt.s32.totalorder %s23, 0
      %s237 = scalar_select %p236, %s23, 0
      %s238 = smul.addr %s235, 4
      %s239 = sadd.s32 %s237, %s238
      %s240 = smul.addr %s239, 8
      %s241 = scalar_lea.vmem %s5, %s240
      %p242 = scmp.lt.s32.totalorder %s22, 1
      %s243 = scalar_select %p242, %s22, 1
      %p244 = scmp.lt.s32.totalorder %s23, 0
      %s245 = scalar_select %p244, %s23, 0
      %s246 = smul.addr %s243, 7
      %s247 = sadd.s32 %s245, %s246
      %s248 = smul.addr %s247, 8
      %s249 = scalar_lea.vmem %s0, %s248
      %p250 = scmp.lt.s32.totalorder %s22, 1
      %s251 = scalar_select %p250, %s22, 1
      %p252 = scmp.lt.s32.totalorder %s23, 0
      %s253 = scalar_select %p252, %s23, 0
      %s254 = smul.addr %s251, 4
      %s255 = sadd.s32 %s253, %s254
      %s256 = smul.addr %s255, 8
      %s257 = scalar_lea.vmem %s5, %s256
      %v258 = vld [vmem:[%s1] sm:$0xff]
      %v259 = vld [vmem:[%s1 + $0x8] sm:$0xff]
      %v260 = vld [vmem:[%s1 + $0x10] sm:$0xff]
      %v261 = vld [vmem:[%s1 + $0x18] sm:$0xff]
      %v262 = vld [vmem:[%s249] sm:$0xff]
      %v263 = vld [vmem:[%s249 + $0x8] sm:$0xff]
      %v264 = vld [vmem:[%s249 + $0x10] sm:$0xff]
      %v265 = vld [vmem:[%s249 + $0x18] sm:$0xff]
      %v266 = vld [vmem:[%s249 + $0x20] sm:$0xff]
      %v267 = vld [vmem:[%s249 + $0x28] sm:$0xff]
      %v268 = vld [vmem:[%s249 + $0x30] sm:$0x3f]
      %vm269 = vcmask 441344
      %v271 = vsel %vm269, %v258, 0
      %v274 = vsel %vm269, %v259, 0
      %v277 = vsel %vm269, %v260, 0
      %v280 = vsel %vm269, %v261, 0
      %vm282 = vcmask 1045504
      %v284 = vsel %vm282, %v268, 0
      %286 = vmatprep.subr.mxu0 0.0
      %287 = vmatpush1.msra.mxu0 %v262
      %288 = vmatprep.subr.mxu0 0.0
      %289 = vmatpush1.msra.mxu0 %v263
      %290 = vmatprep.subr.mxu0 0.0
      %291 = vmatpush1.msra.mxu0 %v264
      %292 = vmatprep.subr.mxu0 0.0
      %293 = vmatpush1.msra.mxu0 %v265
      %294 = vmatprep.subr.mxu0 0.0
      %295 = vmatpush1.msra.mxu0 %v266
      %296 = vmatprep.subr.mxu0 0.0
      %297 = vmatpush1.msra.mxu0 %v267
      %298 = vmatprep.subr.mxu0 0.0
      %299 = vmatpush1.msra.mxu0 %v284
      %300 = vmatprep.subr.mxu0 0.0
      %301 = vmatpush1.msra.mxu0 0.0
      %302 = vmatprep.subr.mxu0 0.0
      %303 = vmatpush1.msra.mxu0 0.0
      %304 = vmatprep.subr.mxu0 0.0
      %305 = vmatpush1.msra.mxu0 0.0
      %306 = vmatprep.subr.mxu0 0.0
      %307 = vmatpush1.msra.mxu0 0.0
      %308 = vmatprep.subr.mxu0 0.0
      %309 = vmatpush1.msra.mxu0 0.0
      %310 = vmatprep.subr.mxu0 0.0
      %311 = vmatpush1.msra.mxu0 0.0
      %312 = vmatprep.subr.mxu0 0.0
      %313 = vmatpush1.msra.mxu0 0.0
      %314 = vmatprep.subr.mxu0 0.0
      %315 = vmatpush1.msra.mxu0 0.0
      %316 = vmatprep.subr.mxu0 0.0
      %317 = vmatpush1.msra.mxu0 0.0
      %318 = vmatprep.subr.mxu0 0.0
      %319 = vmatpush1.msra.mxu0 0.0
      %320 = vmatprep.subr.mxu0 0.0
      %321 = vmatpush1.msra.mxu0 0.0
      %322 = vmatprep.subr.mxu0 0.0
      %323 = vmatpush1.msra.mxu0 0.0
      %324 = vmatprep.subr.mxu0 0.0
      %325 = vmatpush1.msra.mxu0 0.0
      %326 = vmatprep.subr.mxu0 0.0
      %327 = vmatpush1.msra.mxu0 0.0
      %328 = vmatprep.subr.mxu0 0.0
      %329 = vmatpush1.msra.mxu0 0.0
      %330 = vmatprep.subr.mxu0 0.0
      %331 = vmatpush1.msra.mxu0 0.0
      %332 = vmatprep.subr.mxu0 0.0
      %333 = vmatpush1.msra.mxu0 0.0
      %334 = vmatprep.subr.mxu0 0.0
      %335 = vmatpush1.msra.mxu0 0.0
      %336 = vmatprep.subr.mxu0 0.0
      %337 = vmatpush1.msra.mxu0 0.0
      %338 = vmatprep.subr.mxu0 0.0
      %339 = vmatpush1.msra.mxu0 0.0
      %340 = vmatprep.subr.mxu0 0.0
      %341 = vmatpush1.msra.mxu0 0.0
      %342 = vmatprep.subr.mxu0 0.0
      %343 = vmatpush1.msra.mxu0 0.0
      %344 = vmatprep.subr.mxu0 0.0
      %345 = vmatpush1.msra.mxu0 0.0
      %346 = vmatprep.subr.mxu0 0.0
      %347 = vmatpush1.msra.mxu0 0.0
      %348 = vmatprep.subr.mxu0 0.0
      %349 = vmatpush1.msra.mxu0 0.0
      %350 = vmatprep.mubr.f32.mxu0 0.0
      %351 = vmatmul.mubr.f32.gmra.mrb[0].mxu0 %v271
      %v352 = vpop.f32.mrb[0].mxu0
      %v353 = vadd.f32 0.0, %v352
      %v354 = vpop.f32.mrb[0].mxu0
      %355 = vmatprep.mubr.f32.mxu0 0.0
      %356 = vmatmul.mubr.f32.gmra.mrb[0].mxu0 %v274
      %v357 = vpop.f32.mrb[0].mxu0
      %v358 = vadd.f32 0.0, %v357
      %v359 = vpop.f32.mrb[0].mxu0
      %360 = vmatprep.mubr.f32.mxu0 0.0
      %361 = vmatmul.mubr.f32.gmra.mrb[0].mxu0 %v277
      %v362 = vpop.f32.mrb[0].mxu0
      %v363 = vadd.f32 0.0, %v362
      %v364 = vpop.f32.mrb[0].mxu0
      %365 = vmatprep.mubr.f32.mxu0 0.0
      %366 = vmatmul.mubr.f32.gmra.mrb[0].mxu0 %v280
      %v367 = vpop.f32.mrb[0].mxu0
      %v368 = vadd.f32 0.0, %v367
      %v369 = vpop.f32.mrb[0].mxu0
      %370 = vdwg.mxu0
      %v371 = vld [vmem:[%s2] sm:$0xff]
      %v372 = vld [vmem:[%s2 + $0x8] sm:$0xff]
      %v373 = vld [vmem:[%s2 + $0x10] sm:$0xff]
      %v374 = vld [vmem:[%s2 + $0x18] sm:$0xff]
      %376 = vset.pattern.permute.xlu0 0
      %377 = vperm.xlu0 %376, %v371
      %v378 = vpop.permute.xlu0 %377
      %381 = vset.pattern.permute.xlu0 0
      %382 = vperm.xlu0 %381, %v372
      %v383 = vpop.permute.xlu0 %382
      %386 = vset.pattern.permute.xlu0 0
      %387 = vperm.xlu0 %386, %v373
      %v388 = vpop.permute.xlu0 %387
      %391 = vset.pattern.permute.xlu0 0
      %392 = vperm.xlu0 %391, %v374
      %v393 = vpop.permute.xlu0 %392
      %v395 = vmul.f32 %v353, %v378
      %v396 = vmul.f32 %v358, %v383
      %v397 = vmul.f32 %v363, %v388
      %v398 = vmul.f32 %v368, %v393
      %v399 = vld [vmem:[%s3] sm:$0xff]
      %v400 = vld [vmem:[%s3 + $0x8] sm:$0xff]
      %v401 = vld [vmem:[%s3 + $0x10] sm:$0xff]
      %v402 = vld [vmem:[%s3 + $0x18] sm:$0xff]
      %404 = vset.pattern.permute.xlu0 0
      %405 = vperm.xlu0 %404, %v399
      %v406 = vpop.permute.xlu0 %405
      %409 = vset.pattern.permute.xlu0 0
      %410 = vperm.xlu0 %409, %v400
      %v411 = vpop.permute.xlu0 %410
      %414 = vset.pattern.permute.xlu0 0
      %415 = vperm.xlu0 %414, %v401
      %v416 = vpop.permute.xlu0 %415
      %419 = vset.pattern.permute.xlu0 0
      %420 = vperm.xlu0 %419, %v402
      %v421 = vpop.permute.xlu0 %420
      %v423 = vadd.f32 %v395, %v406
      %v424 = vadd.f32 %v396, %v411
      %v425 = vadd.f32 %v397, %v416
      %v426 = vadd.f32 %v398, %v421
      %v427 = vld [vmem:[#allocation2] sm:$0x1]
      %s428 = vtos %v427
      %vm429 = vcmp.ge.f32.partialorder %v423, 0.0
      %vm430 = vcmp.ge.f32.partialorder %v424, 0.0
      %vm431 = vcmp.ge.f32.partialorder %v425, 0.0
      %vm432 = vcmp.ge.f32.partialorder %v426, 0.0
      %v433 = vstv %s428
      %v434 = vmul.f32 %v433, %v423
      %v435 = vmul.f32 %v433, %v424
      %v436 = vmul.f32 %v433, %v425
      %v437 = vmul.f32 %v433, %v426
      %v438 = vsel %vm429, %v423, %v434
      %v439 = vsel %vm430, %v424, %v435
      %v440 = vsel %vm431, %v425, %v436
      %v441 = vsel %vm432, %v426, %v437
      %vm442 = vcmask 523264
      %443 = vst.msk [vmem:[%s257] sm:$0xff] %vm442, %v438
      %444 = vst.msk [vmem:[%s257 + $0x8] sm:$0xff] %vm442, %v439
      %445 = vst.msk [vmem:[%s257 + $0x10] sm:$0xff] %vm442, %v440
      %446 = vst.msk [vmem:[%s257 + $0x18] sm:$0xff] %vm442, %v441
      %p447 = scmp.lt.s32.totalorder %s22, 1
      %s448 = scalar_select %p447, %s22, 1
      %p449 = scmp.lt.s32.totalorder %s23, 0
      %s450 = scalar_select %p449, %s23, 0
      %s451 = smul.addr %s448, 4
      %s452 = sadd.s32 %s450, %s451
      %s453 = smul.addr %s452, 8
      %s454 = scalar_lea.vmem %s5, %s453
      // Predicated region
      $region41: #{enet_initial_block.3} parent=39 // pred_check
        %p455 = pneg %p162
      $region42: #{enet_initial_block.3} parent=39 // pred_check_branch
        %457 = sbr.rel (%p455) target = $region44
      $region43: #{enet_initial_block.3} parent=39 // pred_region
        _
      $region44: #{enet_initial_block.3} parent=39 // pred_fallthru
        _
    $region40: #{enet_initial_block.3} parent=5 // pred_fallthru
      _
    %p458 = scmp.le.s32.totalorder 2, %s13
    // Predicated region
    $region45: #{enet_initial_block.3} parent=5 // pred_check
      %p459 = pneg %p458
    $region46: #{enet_initial_block.3} parent=5 // pred_check_branch
      %461 = sbr.rel (%p459) target = $region48
    $region47: #{enet_initial_block.3} parent=5 // pred_region
      %s462 = ssub.s32 %s13, 2
      // Predicated region
      $region49: #{enet_initial_block.3} parent=47 // pred_check
        %p463 = pneg %p168
      $region50: #{enet_initial_block.3} parent=47 // pred_check_branch
        %465 = sbr.rel (%p463) target = $region52
      $region51: #{enet_initial_block.3} parent=47 // pred_region
        %p466 = scmp.lt.s32.totalorder %s24, 1
        %s467 = scalar_select %p466, %s24, 1
        %p468 = scmp.lt.s32.totalorder %s25, 0
        %s469 = scalar_select %p468, %s25, 0
        %s470 = smul.addr %s467, 4
        %s471 = sadd.s32 %s469, %s470
        %s472 = smul.addr %s471, 8
        %s473 = scalar_lea.vmem %s5, %s472
      $region52: #{enet_initial_block.3} parent=47 // pred_fallthru
        _
    $region48: #{enet_initial_block.3} parent=5 // pred_fallthru
      _
  $region6: #{enet_initial_block.3} parent=0 // loop_footer
    %s17 = sadd.s32 1, %s13
  $region7: #{enet_initial_block.3} parent=0 // loop_footer_branch
    %12 = sbr.rel target = $region3
  $region8: #{enet_initial_block.3} parent=0 // loop_exit
    _

// kernel: enet_initial_block.2
$region0: #{enet_initial_block.2}
  #allocation0 [shape = 'u32[]', space=smem, size = 0x4, offset = 0x4, fixed_abs, tag = 'smem constant byte address 0x4 - core index']
  #allocation1 [shape = 'u32[144,128]{1,0:T(1,128)}', space=vmem, size = 0x12000, scoped, tag = 'internal scratch']
  %s0 = inlined_call_operand.vmem [shape: f32[2,54,64], index: 0, kind: input, shape index: {}]
  %s1 = inlined_call_operand.vmem [shape: f32[32,54], index: 1, kind: input, shape index: {}]
  %s2 = inlined_call_operand.vmem [shape: f32[2,1,32,1], index: 2, kind: output, shape index: {0}]
  %s3 = inlined_call_operand.vmem [shape: f32[2,1,32,1], index: 3, kind: output, shape index: {1}]
  %4 = xla_tuple %s2, %s3
  %s5 = sld [smem:[#allocation0]]
  $region49: #{enet_initial_block.2} parent=0
    _
  %s7 = ssub.s32 1, %s5
  %s8 = scalar_select 0, %s7, %s5
  loop: start=0, step=1, limit=4
  $region2: #{enet_initial_block.2} parent=0 // loop_pre_header
    _
  $region3: #{enet_initial_block.2} parent=0 // loop_header
    %s10 = sphi 0, %s14
    %p11 = scmp.ge.s32.totalorder %s10, 4
    %s17 = sphi 0, %s29
    %s18 = sphi 0, %s25
    %s19 = sphi 0, %s17
    %s20 = sphi 0, %s18
    %s21 = sphi 0, %s19
    %s22 = sphi 0, %s20
    %s34 = sphi 0, %s36
    %s37 = sphi 0, %s34
    %s38 = sphi 0, %s37
    %s54 = sphi 0, %s38
    %s58 = sphi 0, %s58
    %s60 = sphi 0, %s58
    %s61 = sphi 0, %s60
    %s75 = sphi 0, %s61
    %s83 = sphi 0, %s85
    %s86 = sphi 0, %s83
    %s87 = sphi 0, %s86
    %s103 = sphi 0, %s87
    %s111 = sphi 0, %s113
    %s114 = sphi 0, %s111
    %s115 = sphi 0, %s114
    %s131 = sphi 0, %s115
  $region4: #{enet_initial_block.2} parent=0 // loop_header_branch
    %13 = sbr.rel (%p11) target = $region8
  $region5: #{enet_initial_block.2} parent=0 // loop_body
    %s15 = ssub.s32 %s10, 1
    %s16 = ssub.s32 %s10, 2
    %s23 = sadd.s32 1, %s18
    %p24 = scmp.ge.s32.totalorder %s23, 1
    %s25 = scalar_select %p24, 0, %s23
    %s26 = sadd.s32 1, %s17
    %s27 = scalar_select %p24, %s26, %s17
    %p28 = scmp.ge.s32.totalorder %s27, 2
    %s29 = scalar_select %p28, 0, %s27
    %s30 = ssub.s32 %s17, %s29
    %s31 = ssub.s32 %s18, %s25
    %s32 = sor.u32 %s30, %s31
    %p33 = scmp.eq.s32.totalorder %s32, 0
    %s35 = sadd.s32 %s34, 1
    %s36 = scalar_select %p33, %s34, %s35
    %p39 = pneg %p33
    %p40 = scmp.eq.s32.totalorder %s10, 1
    %p41 = por %p39, %p40
    %p42 = scmp.ne.s32.totalorder %s34, %s37
    %p43 = scmp.eq.s32.totalorder %s10, 0
    %p44 = por %p42, %p43
    %p45 = scmp.ne.s32.totalorder %s34, %s37
    %p46 = scmp.eq.s32.totalorder %s15, 1
    %p47 = por %p45, %p46
    %p48 = scmp.ne.s32.totalorder %s37, %s38
    %p49 = scmp.eq.s32.totalorder %s15, 0
    %p50 = por %p48, %p49
    %p51 = scmp.ne.s32.totalorder %s37, %s38
    %p52 = scmp.eq.s32.totalorder %s16, 1
    %p53 = por %p51, %p52
    %p55 = scmp.ne.s32.totalorder %s38, %s54
    %p56 = scmp.eq.s32.totalorder %s16, 0
    %p57 = por %p55, %p56
    %s59 = sadd.s32 %s58, 1
    %p62 = scmp.eq.s32.totalorder %s10, 1
    %p63 = scmp.ne.s32.totalorder %s58, %s60
    %p64 = scmp.eq.s32.totalorder %s10, 0
    %p65 = por %p63, %p64
    %p66 = scmp.ne.s32.totalorder %s58, %s60
    %p67 = scmp.eq.s32.totalorder %s15, 1
    %p68 = por %p66, %p67
    %p69 = scmp.ne.s32.totalorder %s60, %s61
    %p70 = scmp.eq.s32.totalorder %s15, 0
    %p71 = por %p69, %p70
    %p72 = scmp.ne.s32.totalorder %s60, %s61
    %p73 = scmp.eq.s32.totalorder %s16, 1
    %p74 = por %p72, %p73
    %p76 = scmp.ne.s32.totalorder %s61, %s75
    %p77 = scmp.eq.s32.totalorder %s16, 0
    %p78 = por %p76, %p77
    %s79 = ssub.s32 %s17, %s29
    %s80 = ssub.s32 %s18, %s25
    %s81 = sor.u32 %s79, %s80
    %p82 = scmp.eq.s32.totalorder %s81, 0
    %s84 = sadd.s32 %s83, 1
    %s85 = scalar_select %p82, %s83, %s84
    %p88 = pneg %p82
    %p89 = scmp.eq.s32.totalorder %s10, 1
    %p90 = por %p88, %p89
    %p91 = scmp.ne.s32.totalorder %s83, %s86
    %p92 = scmp.eq.s32.totalorder %s10, 0
    %p93 = por %p91, %p92
    %p94 = scmp.ne.s32.totalorder %s83, %s86
    %p95 = scmp.eq.s32.totalorder %s15, 1
    %p96 = por %p94, %p95
    %p97 = scmp.ne.s32.totalorder %s86, %s87
    %p98 = scmp.eq.s32.totalorder %s15, 0
    %p99 = por %p97, %p98
    %p100 = scmp.ne.s32.totalorder %s86, %s87
    %p101 = scmp.eq.s32.totalorder %s16, 1
    %p102 = por %p100, %p101
    %p104 = scmp.ne.s32.totalorder %s87, %s103
    %p105 = scmp.eq.s32.totalorder %s16, 0
    %p106 = por %p104, %p105
    %s107 = ssub.s32 %s17, %s29
    %s108 = ssub.s32 %s18, %s25
    %s109 = sor.u32 %s107, %s108
    %p110 = scmp.eq.s32.totalorder %s109, 0
    %s112 = sadd.s32 %s111, 1
    %s113 = scalar_select %p110, %s111, %s112
    %p116 = pneg %p110
    %p117 = scmp.eq.s32.totalorder %s10, 1
    %p118 = por %p116, %p117
    %p119 = scmp.ne.s32.totalorder %s111, %s114
    %p120 = scmp.eq.s32.totalorder %s10, 0
    %p121 = por %p119, %p120
    %p122 = scmp.ne.s32.totalorder %s111, %s114
    %p123 = scmp.eq.s32.totalorder %s15, 1
    %p124 = por %p122, %p123
    %p125 = scmp.ne.s32.totalorder %s114, %s115
    %p126 = scmp.eq.s32.totalorder %s15, 0
    %p127 = por %p125, %p126
    %p128 = scmp.ne.s32.totalorder %s114, %s115
    %p129 = scmp.eq.s32.totalorder %s16, 1
    %p130 = por %p128, %p129
    %p132 = scmp.ne.s32.totalorder %s115, %s131
    %p133 = scmp.eq.s32.totalorder %s16, 0
    %p134 = por %p132, %p133
    %p135 = scmp.le.s32.totalorder 1, %s10
    %p136 = scmp.lt.s32.totalorder %s10, 3
    %p137 = pnand %p135, %p136
    %p138 = pneg %p137
    // Predicated region
    $region9: #{enet_initial_block.2} parent=5 // pred_check
      _
    $region10: #{enet_initial_block.2} parent=5 // pred_check_branch
      %140 = sbr.rel (%p137) target = $region12
    $region11: #{enet_initial_block.2} parent=5 // pred_region
      %s141 = ssub.s32 %s10, 1
      // Predicated region
      $region13: #{enet_initial_block.2} parent=11 // pred_check
        %p142 = pneg %p71
      $region14: #{enet_initial_block.2} parent=11 // pred_check_branch
        %144 = sbr.rel (%p142) target = $region16
      $region15: #{enet_initial_block.2} parent=11 // pred_region
        _
      $region16: #{enet_initial_block.2} parent=11 // pred_fallthru
        _
    $region12: #{enet_initial_block.2} parent=5 // pred_fallthru
      _
    %p145 = scmp.lt.s32.totalorder %s10, 2
    // Predicated region
    $region17: #{enet_initial_block.2} parent=5 // pred_check
      %p146 = pneg %p145
    $region18: #{enet_initial_block.2} parent=5 // pred_check_branch
      %148 = sbr.rel (%p146) target = $region20
    $region19: #{enet_initial_block.2} parent=5 // pred_region
      // Predicated region
      $region21: #{enet_initial_block.2} parent=19 // pred_check
        %p149 = pneg %p44
      $region22: #{enet_initial_block.2} parent=19 // pred_check_branch
        %151 = sbr.rel (%p149) target = $region24
      $region23: #{enet_initial_block.2} parent=19 // pred_region
        %p152 = scmp.lt.s32.totalorder %s17, 1
        %s153 = scalar_select %p152, %s17, 1
        %p154 = scmp.lt.s32.totalorder %s18, 0
        %s155 = scalar_select %p154, %s18, 0
        %s156 = smul.addr %s153, 7
        %s157 = sadd.s32 %s155, %s156
        %s158 = smul.addr %s157, 8
        %s159 = scalar_lea.vmem %s0, %s158
      $region24: #{enet_initial_block.2} parent=19 // pred_fallthru
        _
    $region20: #{enet_initial_block.2} parent=5 // pred_fallthru
      _
    %p160 = scmp.le.s32.totalorder 1, %s10
    %p161 = scmp.lt.s32.totalorder %s10, 3
    %p162 = pnand %p160, %p161
    %p163 = pneg %p162
    // Predicated region
    $region25: #{enet_initial_block.2} parent=5 // pred_check
      _
    $region26: #{enet_initial_block.2} parent=5 // pred_check_branch
      %165 = sbr.rel (%p162) target = $region28
    $region27: #{enet_initial_block.2} parent=5 // pred_region
      %s166 = ssub.s32 %s10, 1
      %p167 = scmp.lt.s32.totalorder %s19, 1
      %s168 = scalar_select %p167, %s19, 1
      %p169 = scmp.lt.s32.totalorder %s20, 0
      %s170 = scalar_select %p169, %s20, 0
      %s171 = smul.addr %s168, 7
      %s172 = sadd.s32 %s170, %s171
      %s173 = smul.addr %s172, 8
      %s174 = scalar_lea.vmem %s0, %s173
      %p175 = pneg %p50
      %p176 = pneg %p47
      %p177 = pneg %p71
      %p178 = pneg %p68
      %p179 = pneg %p99
      %p180 = pneg %p96
      %p181 = scmp.lt.s32.totalorder %s19, 1
      %s182 = scalar_select %p181, %s19, 1
      %p183 = scmp.lt.s32.totalorder %s20, 0
      %s184 = scalar_select %p183, %s20, 0
      %s185 = smul.addr %s184, 4
      %s186 = smul.addr %s182, 4
      %s187 = sadd.s32 %s185, %s186
      %s188 = smul.addr %s187, 8
      %s189 = scalar_lea.vmem %s2, %s188
      %p190 = pneg %p127
      %p191 = pneg %p124
      %p192 = scmp.lt.s32.totalorder %s19, 1
      %s193 = scalar_select %p192, %s19, 1
      %p194 = scmp.lt.s32.totalorder %s20, 0
      %s195 = scalar_select %p194, %s20, 0
      %s196 = smul.addr %s195, 4
      %s197 = smul.addr %s193, 4
      %s198 = sadd.s32 %s196, %s197
      %s199 = smul.addr %s198, 8
      %s200 = scalar_lea.vmem %s3, %s199
      %p201 = scmp.lt.s32.totalorder %s19, 1
      %s202 = scalar_select %p201, %s19, 1
      %p203 = scmp.lt.s32.totalorder %s20, 0
      %s204 = scalar_select %p203, %s20, 0
      %s205 = smul.addr %s202, 7
      %s206 = sadd.s32 %s204, %s205
      %s207 = smul.addr %s206, 8
      %s208 = scalar_lea.vmem %s0, %s207
      %p209 = scmp.lt.s32.totalorder %s19, 1
      %s210 = scalar_select %p209, %s19, 1
      %p211 = scmp.lt.s32.totalorder %s20, 0
      %s212 = scalar_select %p211, %s20, 0
      %s213 = smul.addr %s212, 4
      %s214 = smul.addr %s210, 4
      %s215 = sadd.s32 %s213, %s214
      %s216 = smul.addr %s215, 8
      %s217 = scalar_lea.vmem %s2, %s216
      %p218 = scmp.lt.s32.totalorder %s19, 1
      %s219 = scalar_select %p218, %s19, 1
      %p220 = scmp.lt.s32.totalorder %s20, 0
      %s221 = scalar_select %p220, %s20, 0
      %s222 = smul.addr %s221, 4
      %s223 = smul.addr %s219, 4
      %s224 = sadd.s32 %s222, %s223
      %s225 = smul.addr %s224, 8
      %s226 = scalar_lea.vmem %s3, %s225
      %v227 = vld [vmem:[%s1] sm:$0xff]
      %v228 = vld [vmem:[%s1 + $0x8] sm:$0xff]
      %v229 = vld [vmem:[%s1 + $0x10] sm:$0xff]
      %v230 = vld [vmem:[%s1 + $0x18] sm:$0xff]
      %v231 = vld [vmem:[%s208] sm:$0xff]
      %v232 = vld [vmem:[%s208 + $0x8] sm:$0xff]
      %v233 = vld [vmem:[%s208 + $0x10] sm:$0xff]
      %v234 = vld [vmem:[%s208 + $0x18] sm:$0xff]
      %v235 = vld [vmem:[%s208 + $0x20] sm:$0xff]
      %v236 = vld [vmem:[%s208 + $0x28] sm:$0xff]
      %v237 = vld [vmem:[%s208 + $0x30] sm:$0x3f]
      %vm238 = vcmask 441344
      %v240 = vsel %vm238, %v227, 0
      %v243 = vsel %vm238, %v228, 0
      %v246 = vsel %vm238, %v229, 0
      %v249 = vsel %vm238, %v230, 0
      %vm251 = vcmask 1045504
      %v253 = vsel %vm251, %v237, 0
      %255 = vmatprep.subr.mxu0 0.0
      %256 = vmatpush1.msra.mxu0 %v231
      %257 = vmatprep.subr.mxu0 0.0
      %258 = vmatpush1.msra.mxu0 %v232
      %259 = vmatprep.subr.mxu0 0.0
      %260 = vmatpush1.msra.mxu0 %v233
      %261 = vmatprep.subr.mxu0 0.0
      %262 = vmatpush1.msra.mxu0 %v234
      %263 = vmatprep.subr.mxu0 0.0
      %264 = vmatpush1.msra.mxu0 %v235
      %265 = vmatprep.subr.mxu0 0.0
      %266 = vmatpush1.msra.mxu0 %v236
      %267 = vmatprep.subr.mxu0 0.0
      %268 = vmatpush1.msra.mxu0 %v253
      %269 = vmatprep.subr.mxu0 0.0
      %270 = vmatpush1.msra.mxu0 0.0
      %271 = vmatprep.subr.mxu0 0.0
      %272 = vmatpush1.msra.mxu0 0.0
      %273 = vmatprep.subr.mxu0 0.0
      %274 = vmatpush1.msra.mxu0 0.0
      %275 = vmatprep.subr.mxu0 0.0
      %276 = vmatpush1.msra.mxu0 0.0
      %277 = vmatprep.subr.mxu0 0.0
      %278 = vmatpush1.msra.mxu0 0.0
      %279 = vmatprep.subr.mxu0 0.0
      %280 = vmatpush1.msra.mxu0 0.0
      %281 = vmatprep.subr.mxu0 0.0
      %282 = vmatpush1.msra.mxu0 0.0
      %283 = vmatprep.subr.mxu0 0.0
      %284 = vmatpush1.msra.mxu0 0.0
      %285 = vmatprep.subr.mxu0 0.0
      %286 = vmatpush1.msra.mxu0 0.0
      %287 = vmatprep.subr.mxu0 0.0
      %288 = vmatpush1.msra.mxu0 0.0
      %289 = vmatprep.subr.mxu0 0.0
      %290 = vmatpush1.msra.mxu0 0.0
      %291 = vmatprep.subr.mxu0 0.0
      %292 = vmatpush1.msra.mxu0 0.0
      %293 = vmatprep.subr.mxu0 0.0
      %294 = vmatpush1.msra.mxu0 0.0
      %295 = vmatprep.subr.mxu0 0.0
      %296 = vmatpush1.msra.mxu0 0.0
      %297 = vmatprep.subr.mxu0 0.0
      %298 = vmatpush1.msra.mxu0 0.0
      %299 = vmatprep.subr.mxu0 0.0
      %300 = vmatpush1.msra.mxu0 0.0
      %301 = vmatprep.subr.mxu0 0.0
      %302 = vmatpush1.msra.mxu0 0.0
      %303 = vmatprep.subr.mxu0 0.0
      %304 = vmatpush1.msra.mxu0 0.0
      %305 = vmatprep.subr.mxu0 0.0
      %306 = vmatpush1.msra.mxu0 0.0
      %307 = vmatprep.subr.mxu0 0.0
      %308 = vmatpush1.msra.mxu0 0.0
      %309 = vmatprep.subr.mxu0 0.0
      %310 = vmatpush1.msra.mxu0 0.0
      %311 = vmatprep.subr.mxu0 0.0
      %312 = vmatpush1.msra.mxu0 0.0
      %313 = vmatprep.subr.mxu0 0.0
      %314 = vmatpush1.msra.mxu0 0.0
      %315 = vmatprep.subr.mxu0 0.0
      %316 = vmatpush1.msra.mxu0 0.0
      %317 = vmatprep.subr.mxu0 0.0
      %318 = vmatpush1.msra.mxu0 0.0
      %319 = vmatprep.mubr.f32.mxu0 0.0
      %320 = vmatmul.mubr.f32.gmra.mrb[0].mxu0 %v240
      %v321 = vpop.f32.mrb[0].mxu0
      %v322 = vadd.f32 0.0, %v321
      %v323 = vpop.f32.mrb[0].mxu0
      %324 = vmatprep.mubr.f32.mxu0 0.0
      %325 = vmatmul.mubr.f32.gmra.mrb[0].mxu0 %v243
      %v326 = vpop.f32.mrb[0].mxu0
      %v327 = vadd.f32 0.0, %v326
      %v328 = vpop.f32.mrb[0].mxu0
      %329 = vmatprep.mubr.f32.mxu0 0.0
      %330 = vmatmul.mubr.f32.gmra.mrb[0].mxu0 %v246
      %v331 = vpop.f32.mrb[0].mxu0
      %v332 = vadd.f32 0.0, %v331
      %v333 = vpop.f32.mrb[0].mxu0
      %334 = vmatprep.mubr.f32.mxu0 0.0
      %335 = vmatmul.mubr.f32.gmra.mrb[0].mxu0 %v249
      %v336 = vpop.f32.mrb[0].mxu0
      %v337 = vadd.f32 0.0, %v336
      %v338 = vpop.f32.mrb[0].mxu0
      %339 = vdwg.mxu0
      %vm340 = vcmask 523264
      %v341 = vsel %vm340, %v322, 0.0
      %342 = vadd.xlane.f32.xlu0 %v341
      %v343 = vpop.xlane.xlu0 %342
      %v344 = vsel %vm340, %v327, 0.0
      %345 = vadd.xlane.f32.xlu0 %v344
      %v346 = vpop.xlane.xlu0 %345
      %v347 = vsel %vm340, %v332, 0.0
      %348 = vadd.xlane.f32.xlu0 %v347
      %v349 = vpop.xlane.xlu0 %348
      %v350 = vsel %vm340, %v337, 0.0
      %351 = vadd.xlane.f32.xlu0 %v350
      %v352 = vpop.xlane.xlu0 %351
      %v353 = vmul.f32 %v343, 0.015625
      %v354 = vmul.f32 %v346, 0.015625
      %v355 = vmul.f32 %v349, 0.015625
      %v356 = vmul.f32 %v352, 0.015625
      %v357 = vsub.f32 %v322, %v353
      %v358 = vsub.f32 %v327, %v354
      %v359 = vsub.f32 %v332, %v355
      %v360 = vsub.f32 %v337, %v356
      %v361 = vmul.f32 %v357, %v357
      %v362 = vmul.f32 %v358, %v358
      %v363 = vmul.f32 %v359, %v359
      %v364 = vmul.f32 %v360, %v360
      %v365 = vsel %vm340, %v361, 0.0
      %366 = vadd.xlane.f32.xlu0 %v365
      %v367 = vpop.xlane.xlu0 %366
      %v368 = vsel %vm340, %v362, 0.0
      %369 = vadd.xlane.f32.xlu0 %v368
      %v370 = vpop.xlane.xlu0 %369
      %v371 = vsel %vm340, %v363, 0.0
      %372 = vadd.xlane.f32.xlu0 %v371
      %v373 = vpop.xlane.xlu0 %372
      %v374 = vsel %vm340, %v364, 0.0
      %375 = vadd.xlane.f32.xlu0 %v374
      %v376 = vpop.xlane.xlu0 %375
      %vm377 = vcmask 7168
      %378 = vst.msk [vmem:[%s217] sm:$0xff] %vm377, %v343
      %379 = vst.msk [vmem:[%s217 + $0x8] sm:$0xff] %vm377, %v346
      %380 = vst.msk [vmem:[%s217 + $0x10] sm:$0xff] %vm377, %v349
      %381 = vst.msk [vmem:[%s217 + $0x18] sm:$0xff] %vm377, %v352
      %382 = vst.msk [vmem:[%s226] sm:$0xff] %vm377, %v367
      %383 = vst.msk [vmem:[%s226 + $0x8] sm:$0xff] %vm377, %v370
      %384 = vst.msk [vmem:[%s226 + $0x10] sm:$0xff] %vm377, %v373
      %385 = vst.msk [vmem:[%s226 + $0x18] sm:$0xff] %vm377, %v376
      %p386 = scmp.lt.s32.totalorder %s19, 1
      %s387 = scalar_select %p386, %s19, 1
      %p388 = scmp.lt.s32.totalorder %s20, 0
      %s389 = scalar_select %p388, %s20, 0
      %s390 = smul.addr %s389, 4
      %s391 = smul.addr %s387, 4
      %s392 = sadd.s32 %s390, %s391
      %s393 = smul.addr %s392, 8
      %s394 = scalar_lea.vmem %s2, %s393
      %p395 = scmp.lt.s32.totalorder %s19, 1
      %s396 = scalar_select %p395, %s19, 1
      %p397 = scmp.lt.s32.totalorder %s20, 0
      %s398 = scalar_select %p397, %s20, 0
      %s399 = smul.addr %s398, 4
      %s400 = smul.addr %s396, 4
      %s401 = sadd.s32 %s399, %s400
      %s402 = smul.addr %s401, 8
      %s403 = scalar_lea.vmem %s3, %s402
      // Predicated region
      $region29: #{enet_initial_block.2} parent=27 // pred_check
        %p404 = pneg %p96
      $region30: #{enet_initial_block.2} parent=27 // pred_check_branch
        %406 = sbr.rel (%p404) target = $region32
      $region31: #{enet_initial_block.2} parent=27 // pred_region
        _
      $region32: #{enet_initial_block.2} parent=27 // pred_fallthru
        _
      // Predicated region
      $region33: #{enet_initial_block.2} parent=27 // pred_check
        %p407 = pneg %p124
      $region34: #{enet_initial_block.2} parent=27 // pred_check_branch
        %409 = sbr.rel (%p407) target = $region36
      $region35: #{enet_initial_block.2} parent=27 // pred_region
        _
      $region36: #{enet_initial_block.2} parent=27 // pred_fallthru
        _
    $region28: #{enet_initial_block.2} parent=5 // pred_fallthru
      _
    %p410 = scmp.le.s32.totalorder 2, %s10
    // Predicated region
    $region37: #{enet_initial_block.2} parent=5 // pred_check
      %p411 = pneg %p410
    $region38: #{enet_initial_block.2} parent=5 // pred_check_branch
      %413 = sbr.rel (%p411) target = $region40
    $region39: #{enet_initial_block.2} parent=5 // pred_region
      %s414 = ssub.s32 %s10, 2
      // Predicated region
      $region41: #{enet_initial_block.2} parent=39 // pred_check
        %p415 = pneg %p102
      $region42: #{enet_initial_block.2} parent=39 // pred_check_branch
        %417 = sbr.rel (%p415) target = $region44
      $region43: #{enet_initial_block.2} parent=39 // pred_region
        %p418 = scmp.lt.s32.totalorder %s21, 1
        %s419 = scalar_select %p418, %s21, 1
        %p420 = scmp.lt.s32.totalorder %s22, 0
        %s421 = scalar_select %p420, %s22, 0
        %s422 = smul.addr %s421, 4
        %s423 = smul.addr %s419, 4
        %s424 = sadd.s32 %s422, %s423
        %s425 = smul.addr %s424, 8
        %s426 = scalar_lea.vmem %s2, %s425
      $region44: #{enet_initial_block.2} parent=39 // pred_fallthru
        _
      // Predicated region
      $region45: #{enet_initial_block.2} parent=39 // pred_check
        %p427 = pneg %p130
      $region46: #{enet_initial_block.2} parent=39 // pred_check_branch
        %429 = sbr.rel (%p427) target = $region48
      $region47: #{enet_initial_block.2} parent=39 // pred_region
        %p430 = scmp.lt.s32.totalorder %s21, 1
        %s431 = scalar_select %p430, %s21, 1
        %p432 = scmp.lt.s32.totalorder %s22, 0
        %s433 = scalar_select %p432, %s22, 0
        %s434 = smul.addr %s433, 4
        %s435 = smul.addr %s431, 4
        %s436 = sadd.s32 %s434, %s435
        %s437 = smul.addr %s436, 8
        %s438 = scalar_lea.vmem %s3, %s437
      $region48: #{enet_initial_block.2} parent=39 // pred_fallthru
        _
    $region40: #{enet_initial_block.2} parent=5 // pred_fallthru
      _
  $region6: #{enet_initial_block.2} parent=0 // loop_footer
    %s14 = sadd.s32 1, %s10
  $region7: #{enet_initial_block.2} parent=0 // loop_footer_branch
    %9 = sbr.rel target = $region3
  $region8: #{enet_initial_block.2} parent=0 // loop_exit
    _

</llo_original>
